<compile_context>
chip_gen: v5e
topology: v5e:2x2
jax: 0.10.0
libtpu: 0.0.40
codegen_flags: <defaults>
</compile_context>

<pallas_src>
import functools

import jax
import jax.numpy as jnp
from jax.experimental import pallas as pl
from jax.experimental.pallas import tpu as pltpu


# ----------------------------------------------------------------------------
# Buffer construction (plain JAX glue, matches generate_sinusoids)
# ----------------------------------------------------------------------------
def generate_sinusoids(length: int, channels: int, max_timescale: float = 10000.0):
    assert channels % 2 == 0
    log_timescale_increment = jnp.log(max_timescale) / (channels // 2 - 1)
    inv_timescales = jnp.exp(
        -log_timescale_increment * jnp.arange(channels // 2, dtype=jnp.float32)
    )
    scaled_time = (
        jnp.arange(length, dtype=jnp.float32)[:, None] * inv_timescales[None, :]
    )
    return jnp.concatenate([jnp.sin(scaled_time), jnp.cos(scaled_time)], axis=1)


# ----------------------------------------------------------------------------
# Pallas kernel: y = x * sqrt(d_model) + pos   (+ optional inverted dropout)
# ----------------------------------------------------------------------------
def _pos_emb_kernel(seed_ref, x_ref, pos_ref, o_ref, *, scale, dropout_p, training):
    # x_ref:   (1, TR, C) VMEM tile for one batch element / row tile
    # pos_ref: (TR, C)    VMEM tile, shared across the batch (inner grid axis)
    y = x_ref[0] * scale + pos_ref[...]  # stays in x.dtype (scale is weak-typed)

    if training and dropout_p > 0.0:
        # Deterministic per (seed, row_tile, batch) stream so retiling never
        # replays the same mask across tiles of one batch element.
        pltpu.prng_seed(seed_ref[0], pl.program_id(0), pl.program_id(1))
        bits = pltpu.bitcast(pltpu.prng_random_bits(y.shape), jnp.uint32)
        # keep iff bits >= round(p * 2^32): pure unsigned compare, no float convert
        thresh = jnp.uint32(min(int(round(dropout_p * (2.0 ** 32))), (1 << 32) - 1))
        keep = bits >= thresh
        inv_keep = jnp.asarray(1.0 / (1.0 - dropout_p), y.dtype)
        y = y * jnp.where(keep, inv_keep, jnp.asarray(0.0, y.dtype))

    o_ref[0] = y.astype(o_ref.dtype)


def positional_embedding(
    x, pos_embeddings, d_model, *, dropout_p=0.1, training=False, seed=0
):
    """x: (B, S, D); pos_embeddings: (max_len, D). Returns (B, S, D)."""
    B, S, D = x.shape
    scale = float(d_model) ** 0.5
    pos = pos_embeddings[:S].astype(x.dtype)  # (S, D), same dtype as x (bf16-friendly)

    # Lane-dense 2-D layout (R, C) for the trailing (S, D) slab. Alignment of
    # x[b, s, d] with pos[s, d] is preserved because both use the same
    # contiguous reshape of the (S, D) slab.
    if D % 128 == 0:
        R, C = S, D
    elif (S * D) % 128 == 0:
        R, C = (S * D) // 128, 128
    else:
        R, C = S, D  # fallback: compiler emits masked stores (correct, slower)

    x2 = x.reshape(B, R, C)
    pos2 = pos.reshape(R, C)

    # Row tile: ~2 MiB per input tile (measured ~85% of HBM roofline already at
    # 512-row f32 tiles), multiple of 8 sublanes, or the full extent if small.
    itemsize = jnp.dtype(x.dtype).itemsize
    target_bytes = 2 * 1024 * 1024
    tr = max(8, (target_bytes // (C * itemsize)) // 8 * 8)
    TR = R if R <= tr else int(tr)
    n_r = pl.cdiv(R, TR)

    kernel = functools.partial(
        _pos_emb_kernel,
        scale=scale,
        dropout_p=float(dropout_p),
        training=bool(training),
    )

    grid_spec = pltpu.PrefetchScalarGridSpec(
        num_scalar_prefetch=1,  # dropout seed (SMEM scalar)
        grid=(n_r, B),  # batch innermost: pos block index constant -> no re-DMA
        in_specs=[
            pl.BlockSpec((1, TR, C), lambda r, b, seed_ref: (b, r, 0)),
            pl.BlockSpec((TR, C), lambda r, b, seed_ref: (r, 0)),
        ],
        out_specs=pl.BlockSpec((1, TR, C), lambda r, b, seed_ref: (b, r, 0)),
    )

    out = pl.pallas_call(
        kernel,
        out_shape=jax.ShapeDtypeStruct((B, R, C), x.dtype),
        grid_spec=grid_spec,
        compiler_params=pltpu.CompilerParams(
            # Every block is independent -> shard across both TCs on v7x.
            dimension_semantics=("parallel", "parallel"),
            # Explicit budget; small tiles keep us far below 64 MiB (v7x phys).
            vmem_limit_bytes=48 * 1024 * 1024,
        ),
    )(jnp.array([seed], dtype=jnp.int32), x2, pos2)

    return out.reshape(B, S, D)


# ----------------------------------------------------------------------------
# Demo / correctness check (eval mode: dropout is identity -> exact reference)
# ----------------------------------------------------------------------------
if __name__ == "__main__":
    B, S, D = 2, 8, 32  # batch, seq, d_model
    MAX_LEN = 64
    DROPOUT_P = 0.1

    key = jax.random.PRNGKey(0)
    x = jax.random.normal(key, (B, S, D), dtype=jnp.float32)

    pos_embeddings = generate_sinusoids(MAX_LEN, D)  # (max_len, D) buffer

    out = positional_embedding(
        x, pos_embeddings, D, dropout_p=DROPOUT_P, training=False
    )
    out = jax.block_until_ready(out)

    ref = x * (float(D) ** 0.5) + pos_embeddings[:S][None, :, :]
    assert out.shape == (B, S, D)
    assert jnp.allclose(out, ref, atol=1e-5, rtol=1e-5), "mismatch vs reference"

    # TODO(synk): training-mode dropout uses the TPU hardware PRNG
    # (pltpu.prng_*) and is only exercised on a real TPU backend, not in the
    # CPU interpret-mode demo above.

    print("KERNEL_OK")
</pallas_src>

<mosaic_0001>
module attributes {stable_mosaic.version = 11 : i64} {
  func.func @_pos_emb_kernel(%arg0: i32, %arg1: i32, %arg2: memref<1xi32, #tpu.memory_space<smem>>, %arg3: memref<1x2x128xf32, #tpu.memory_space<vmem>>, %arg4: memref<2x128xf32, #tpu.memory_space<vmem>>, %arg5: memref<1x2x128xf32, #tpu.memory_space<vmem>>) attributes {dimension_semantics = [#tpu.dimension_semantics<parallel>, #tpu.dimension_semantics<parallel>], iteration_bounds = array<i64: 1, 2>, scalar_prefetch = 1 : i64, scratch_operands = 0 : i64, tpu.core_type = #tpu.core_type<tc>, window_params = [{transform_indices = @transform_0, window_bounds = array<i64: 1, 2, 128>}, {transform_indices = @transform_1, window_bounds = array<i64: 2, 128>}, {transform_indices = @transform_2, window_bounds = array<i64: 1, 2, 128>}]} {
    %c0 = arith.constant 0 : index
    %c0_0 = arith.constant 0 : index
    %c0_1 = arith.constant 0 : index
    %0 = vector.load %arg3[%c0, %c0_0, %c0_1] : memref<1x2x128xf32, #tpu.memory_space<vmem>>, vector<1x2x128xf32>
    %1 = vector.shape_cast %0 : vector<1x2x128xf32> to vector<2x128xf32>
    %cst = arith.constant 5.65685415 : f32
    %2 = vector.broadcast %cst : f32 to vector<2x128xf32>
    %3 = arith.mulf %1, %2 : vector<2x128xf32>
    %c0_2 = arith.constant 0 : index
    %c0_3 = arith.constant 0 : index
    %4 = vector.load %arg4[%c0_2, %c0_3] : memref<2x128xf32, #tpu.memory_space<vmem>>, vector<2x128xf32>
    %5 = arith.addf %3, %4 : vector<2x128xf32>
    %c0_4 = arith.constant 0 : index
    %c0_5 = arith.constant 0 : index
    %c0_6 = arith.constant 0 : index
    %6 = vector.load %arg5[%c0_4, %c0_5, %c0_6] : memref<1x2x128xf32, #tpu.memory_space<vmem>>, vector<1x2x128xf32>
    %7 = vector.shape_cast %6 : vector<1x2x128xf32> to vector<2x128xf32>
    %8 = vector.shape_cast %5 : vector<2x128xf32> to vector<1x2x128xf32>
    tpu.vector_store %arg5[%c0_4, %c0_5, %c0_6], %8 {strides = array<i32>} : memref<1x2x128xf32, #tpu.memory_space<vmem>>, vector<1x2x128xf32>,
    return
  }
  func.func @transform_0(%arg0: i32, %arg1: i32, %arg2: memref<1xi32, #tpu.memory_space<smem>>) -> (i32, i32, i32) {
    %c0_i32 = arith.constant 0 : i32
    %c0_i32_0 = arith.constant 0 : i32
    return %arg1, %arg0, %c0_i32 : i32, i32, i32
  }
  func.func @transform_1(%arg0: i32, %arg1: i32, %arg2: memref<1xi32, #tpu.memory_space<smem>>) -> (i32, i32) {
    %c0_i32 = arith.constant 0 : i32
    %c0_i32_0 = arith.constant 0 : i32
    return %arg0, %c0_i32 : i32, i32
  }
  func.func @transform_2(%arg0: i32, %arg1: i32, %arg2: memref<1xi32, #tpu.memory_space<smem>>) -> (i32, i32, i32) {
    %c0_i32 = arith.constant 0 : i32
    %c0_i32_0 = arith.constant 0 : i32
    return %arg1, %arg0, %c0_i32 : i32, i32, i32
  }
}

</mosaic_0001>

<llo_original>
// kernel: tpu_custom_call.1
$region0: #{tpu_custom_call.1}
  #allocation0 [shape = 'u32[]', space=smem, size = 0x4, offset = 0x4, fixed_abs, tag = 'smem constant byte address 0x4 - core index']
  #allocation1 [shape = 'u32[72,128]{1,0:T(1,128)}', space=vmem, size = 0x9000, scoped, tag = 'internal scratch']
  #allocation2 [shape = 's32[1]{0}', space=sflag, size = 0x4, scoped, tag = 'scoped memory for tpu_custom_call.1']
  #allocation3 [shape = 's32[1]{0:T(128)S(6)}', space=smem, size = 0x200, scoped, tag = 'prefetched SMEM operand 0']
  %s0 = inlined_call_operand.<no memory space> [shape: s32[1], index: 0, kind: input, shape index: {}]
  %s1 = inlined_call_operand.hbm [shape: f32[2,2,128], index: 1, kind: input, shape index: {}]
  %s2 = inlined_call_operand.vmem [shape: f32[2,128], index: 2, kind: input, shape index: {}]
  %s3 = inlined_call_operand.hbm [shape: f32[2,2,128], index: 3, kind: output, shape index: {}]
  %s4 = sld [smem:[#allocation0]]
  $region45: #{tpu_custom_call.1} parent=0
    _
  %s6 = ssub.s32 1, %s4
  %s7 = scalar_select 0, %s6, %s4
  %8 = sst [smem:[#allocation3]] %s0
  $region1: #{tpu_custom_call.1} parent=0
    #allocation4 [shape = 'u8[2048]{0}', space=vmem, size = 0x800, scoped, tag = 'input window, operand 1']
    #allocation5 [shape = 's32[2]{0}', space=sflag, size = 0x8, scoped, tag = 'scoped memory for tpu_custom_call.1']
    #allocation6 [shape = 's32[2]{0}', space=sflag, size = 0x8, scoped, tag = 'scoped memory for tpu_custom_call.1']
    #allocation7 [shape = 'u8[2048]{0}', space=vmem, size = 0x800, scoped, tag = 'output window, operand 0']
    %9 = vsyncpa [#allocation5], 0
    %s10 = scalar_lea.sflag [#allocation5], 1
    %11 = vsyncpa %s10, 0
    %12 = vsyncpa [#allocation6], 0
    %s13 = scalar_lea.sflag [#allocation6], 1
    %14 = vsyncpa %s13, 0
    loop: start=0, step=1, limit=4
    $region2: #{tpu_custom_call.1} parent=1 // loop_pre_header
      _
    $region3: #{tpu_custom_call.1} parent=1 // loop_header
      %s16 = sphi 0, %s20
      %p17 = scmp.ge.s32.totalorder %s16, 4
      %s23 = sphi 0, %s35
      %s24 = sphi 0, %s31
      %s25 = sphi 0, %s23
      %s26 = sphi 0, %s24
      %s27 = sphi 0, %s25
      %s28 = sphi 0, %s26
      %s40 = sphi 0, %s42
      %s43 = sphi 0, %s40
      %s44 = sphi 0, %s43
      %s60 = sphi 0, %s44
      %s66 = sphi 0, %s68
      %s69 = sphi 0, %s66
      %s70 = sphi 0, %s69
      %s86 = sphi 0, %s70
      %s94 = sphi 0, %s96
      %s97 = sphi 0, %s94
      %s98 = sphi 0, %s97
      %s114 = sphi 0, %s98
    $region4: #{tpu_custom_call.1} parent=1 // loop_header_branch
      %19 = sbr.rel (%p17) target = $region8
    $region5: #{tpu_custom_call.1} parent=1 // loop_body
      %s21 = ssub.s32 %s16, 1
      %s22 = ssub.s32 %s16, 2
      %s29 = sadd.s32 1, %s24
      %p30 = scmp.ge.s32.totalorder %s29, 2
      %s31 = scalar_select %p30, 0, %s29
      %s32 = sadd.s32 1, %s23
      %s33 = scalar_select %p30, %s32, %s23
      %p34 = scmp.ge.s32.totalorder %s33, 1
      %s35 = scalar_select %p34, 0, %s33
      %s36 = ssub.s32 %s24, %s31
      %s37 = ssub.s32 %s23, %s35
      %s38 = sor.u32 %s36, %s37
      %p39 = scmp.eq.s32.totalorder %s38, 0
      %s41 = sadd.s32 %s40, 1
      %s42 = scalar_select %p39, %s40, %s41
      %p45 = pneg %p39
      %p46 = scmp.eq.s32.totalorder %s16, 1
      %p47 = por %p45, %p46
      %p48 = scmp.ne.s32.totalorder %s40, %s43
      %p49 = scmp.eq.s32.totalorder %s16, 0
      %p50 = por %p48, %p49
      %p51 = scmp.ne.s32.totalorder %s40, %s43
      %p52 = scmp.eq.s32.totalorder %s21, 1
      %p53 = por %p51, %p52
      %p54 = scmp.ne.s32.totalorder %s43, %s44
      %p55 = scmp.eq.s32.totalorder %s21, 0
      %p56 = por %p54, %p55
      %p57 = scmp.ne.s32.totalorder %s43, %s44
      %p58 = scmp.eq.s32.totalorder %s22, 1
      %p59 = por %p57, %p58
      %p61 = scmp.ne.s32.totalorder %s44, %s60
      %p62 = scmp.eq.s32.totalorder %s22, 0
      %p63 = por %p61, %p62
      %s64 = ssub.s32 %s23, %s35
      %p65 = scmp.eq.s32.totalorder %s64, 0
      %s67 = sadd.s32 %s66, 1
      %s68 = scalar_select %p65, %s66, %s67
      %p71 = pneg %p65
      %p72 = scmp.eq.s32.totalorder %s16, 1
      %p73 = por %p71, %p72
      %p74 = scmp.ne.s32.totalorder %s66, %s69
      %p75 = scmp.eq.s32.totalorder %s16, 0
      %p76 = por %p74, %p75
      %p77 = scmp.ne.s32.totalorder %s66, %s69
      %p78 = scmp.eq.s32.totalorder %s21, 1
      %p79 = por %p77, %p78
      %p80 = scmp.ne.s32.totalorder %s69, %s70
      %p81 = scmp.eq.s32.totalorder %s21, 0
      %p82 = por %p80, %p81
      %p83 = scmp.ne.s32.totalorder %s69, %s70
      %p84 = scmp.eq.s32.totalorder %s22, 1
      %p85 = por %p83, %p84
      %p87 = scmp.ne.s32.totalorder %s70, %s86
      %p88 = scmp.eq.s32.totalorder %s22, 0
      %p89 = por %p87, %p88
      %s90 = ssub.s32 %s24, %s31
      %s91 = ssub.s32 %s23, %s35
      %s92 = sor.u32 %s90, %s91
      %p93 = scmp.eq.s32.totalorder %s92, 0
      %s95 = sadd.s32 %s94, 1
      %s96 = scalar_select %p93, %s94, %s95
      %p99 = pneg %p93
      %p100 = scmp.eq.s32.totalorder %s16, 1
      %p101 = por %p99, %p100
      %p102 = scmp.ne.s32.totalorder %s94, %s97
      %p103 = scmp.eq.s32.totalorder %s16, 0
      %p104 = por %p102, %p103
      %p105 = scmp.ne.s32.totalorder %s94, %s97
      %p106 = scmp.eq.s32.totalorder %s21, 1
      %p107 = por %p105, %p106
      %p108 = scmp.ne.s32.totalorder %s97, %s98
      %p109 = scmp.eq.s32.totalorder %s21, 0
      %p110 = por %p108, %p109
      %p111 = scmp.ne.s32.totalorder %s97, %s98
      %p112 = scmp.eq.s32.totalorder %s22, 1
      %p113 = por %p111, %p112
      %p115 = scmp.ne.s32.totalorder %s98, %s114
      %p116 = scmp.eq.s32.totalorder %s22, 0
      %p117 = por %p115, %p116
      %p118 = scmp.le.s32.totalorder 1, %s16
      %p119 = scmp.lt.s32.totalorder %s16, 3
      %p120 = pnand %p118, %p119
      %p121 = pneg %p120
      // Predicated region
      $region9: #{tpu_custom_call.1} parent=5 // pred_check
        _
      $region10: #{tpu_custom_call.1} parent=5 // pred_check_branch
        %123 = sbr.rel (%p120) target = $region12
      $region11: #{tpu_custom_call.1} parent=5 // pred_region
        %s124 = ssub.s32 %s16, 1
        // Predicated region
        $region13: #{tpu_custom_call.1} parent=11 // pred_check
          %p125 = pneg %p82
        $region14: #{tpu_custom_call.1} parent=11 // pred_check_branch
          %127 = sbr.rel (%p125) target = $region16
        $region15: #{tpu_custom_call.1} parent=11 // pred_region
          %p128 = scmp.lt.s32.totalorder %s25, 0
          %s129 = scalar_select %p128, %s25, 0
          %s130 = smul.addr %s129, 2
          %s131 = scalar_lea.vmem %s2, %s130
        $region16: #{tpu_custom_call.1} parent=11 // pred_fallthru
          _
      $region12: #{tpu_custom_call.1} parent=5 // pred_fallthru
        _
      %p132 = scmp.lt.s32.totalorder %s16, 2
      // Predicated region
      $region17: #{tpu_custom_call.1} parent=5 // pred_check
        %p133 = pneg %p132
      $region18: #{tpu_custom_call.1} parent=5 // pred_check_branch
        %135 = sbr.rel (%p133) target = $region20
      $region19: #{tpu_custom_call.1} parent=5 // pred_region
        // Predicated region
        $region21: #{tpu_custom_call.1} parent=19 // pred_check
          %p136 = pneg %p50
        $region22: #{tpu_custom_call.1} parent=19 // pred_check_branch
          %138 = sbr.rel (%p136) target = $region24
        $region23: #{tpu_custom_call.1} parent=19 // pred_region
          %s139 = sand.u32 %s40, 1
          %s140 = scalar_lea.sflag [#allocation5], %s139
          %s141 = sand.u32 %s40, 1
          %s142 = smul.addr %s141, 2
          %s143 = scalar_lea.vmem [#allocation4], %s142
          %145 = vsyncadd %s140, 0
          %s146 = sadd.s32 %s23, %s24
          %s147 = smul.addr %s146, 2
          %s148 = scalar_lea.hbm %s1, %s147
          %s150 = sshll.u32 %s148, 4
          %s151 = int_to_ptr.hbm [resolvable:$true] %s150
          %s152 = sshll.u32 %s143, 4
          %s153 = int_to_ptr.vmem [resolvable:$true] %s152
          %155 = dma.hbm_to_vmem [thread:$0]  %s151, 32, %s153, %s140
        $region24: #{tpu_custom_call.1} parent=19 // pred_fallthru
          _
      $region20: #{tpu_custom_call.1} parent=5 // pred_fallthru
        _
      %p156 = scmp.le.s32.totalorder 1, %s16
      %p157 = scmp.lt.s32.totalorder %s16, 3
      %p158 = pnand %p156, %p157
      %p159 = pneg %p158
      // Predicated region
      $region25: #{tpu_custom_call.1} parent=5 // pred_check
        _
      $region26: #{tpu_custom_call.1} parent=5 // pred_check_branch
        %161 = sbr.rel (%p158) target = $region28
      $region27: #{tpu_custom_call.1} parent=5 // pred_region
        %s162 = ssub.s32 %s16, 1
        %s163 = sand.u32 %s43, 1
        %s164 = scalar_lea.sflag [#allocation5], %s163
        %s165 = sand.u32 %s43, 1
        %s166 = smul.addr %s165, 2
        %s167 = scalar_lea.vmem [#allocation4], %s166
        // Predicated region
        $region29: #{tpu_custom_call.1} parent=27 // pred_check
          %p168 = pneg %p56
        $region30: #{tpu_custom_call.1} parent=27 // pred_check_branch
          %170 = sbr.rel (%p168) target = $region32
        $region31: #{tpu_custom_call.1} parent=27 // pred_region
          %172 = dma.done %s164, 32
        $region32: #{tpu_custom_call.1} parent=27 // pred_fallthru
          _
        %s173 = sand.u32 %s43, 1
        %s174 = scalar_lea.sflag [#allocation5], %s173
        %s175 = sand.u32 %s43, 1
        %s176 = smul.addr %s175, 2
        %s177 = scalar_lea.vmem [#allocation4], %s176
        %p178 = pneg %p56
        %p179 = pneg %p53
        %p180 = scmp.lt.s32.totalorder %s25, 0
        %s181 = scalar_select %p180, %s25, 0
        %s182 = smul.addr %s181, 2
        %s183 = scalar_lea.vmem %s2, %s182
        %p184 = pneg %p82
        %p185 = pneg %p79
        %p186 = pneg %p110
        %p187 = pneg %p107
        %s188 = sand.u32 %s97, 1
        %s189 = scalar_lea.sflag [#allocation6], %s188
        %s190 = sand.u32 %s97, 1
        %s191 = smul.addr %s190, 2
        %s192 = scalar_lea.vmem [#allocation7], %s191
        %p193 = scmp.lt.s32.totalorder %s25, 0
        %s194 = scalar_select %p193, %s25, 0
        %s195 = smul.addr %s194, 2
        %s196 = scalar_lea.vmem %s2, %s195
        %v197 = vld [vmem:[%s167] sm:$0x3]
        %v198 = vmul.f32 %v197, 5.656854
        %v199 = vld [vmem:[%s196] sm:$0x3]
        %v200 = vadd.f32 %v198, %v199
        %201 = vst [vmem:[%s192] sm:$0x3] %v200
        %s202 = sand.u32 %s97, 1
        %s203 = scalar_lea.sflag [#allocation6], %s202
        %s204 = sand.u32 %s97, 1
        %s205 = smul.addr %s204, 2
        %s206 = scalar_lea.vmem [#allocation7], %s205
        // Predicated region
        $region33: #{tpu_custom_call.1} parent=27 // pred_check
          %p207 = pneg %p107
        $region34: #{tpu_custom_call.1} parent=27 // pred_check_branch
          %209 = sbr.rel (%p207) target = $region36
        $region35: #{tpu_custom_call.1} parent=27 // pred_region
          %211 = vsyncadd %s203, 0
          %s212 = sadd.s32 %s25, %s26
          %s213 = smul.addr %s212, 2
          %s214 = scalar_lea.hbm %s3, %s213
          %s216 = sshll.u32 %s206, 4
          %s217 = int_to_ptr.vmem [resolvable:$true] %s216
          %s218 = sshll.u32 %s214, 4
          %s219 = int_to_ptr.hbm [resolvable:$true] %s218
          %221 = dma.vmem_to_hbm [thread:$0]  %s217, 32, %s219, %s203
        $region36: #{tpu_custom_call.1} parent=27 // pred_fallthru
          _
      $region28: #{tpu_custom_call.1} parent=5 // pred_fallthru
        _
      %p222 = scmp.le.s32.totalorder 2, %s16
      // Predicated region
      $region37: #{tpu_custom_call.1} parent=5 // pred_check
        %p223 = pneg %p222
      $region38: #{tpu_custom_call.1} parent=5 // pred_check_branch
        %225 = sbr.rel (%p223) target = $region40
      $region39: #{tpu_custom_call.1} parent=5 // pred_region
        %s226 = ssub.s32 %s16, 2
        // Predicated region
        $region41: #{tpu_custom_call.1} parent=39 // pred_check
          %p227 = pneg %p113
        $region42: #{tpu_custom_call.1} parent=39 // pred_check_branch
          %229 = sbr.rel (%p227) target = $region44
        $region43: #{tpu_custom_call.1} parent=39 // pred_region
          %s230 = sand.u32 %s98, 1
          %s231 = scalar_lea.sflag [#allocation6], %s230
          %s232 = sand.u32 %s98, 1
          %s233 = smul.addr %s232, 2
          %s234 = scalar_lea.vmem [#allocation7], %s233
          %236 = dma.done %s231, 32
        $region44: #{tpu_custom_call.1} parent=39 // pred_fallthru
          _
      $region40: #{tpu_custom_call.1} parent=5 // pred_fallthru
        _
    $region6: #{tpu_custom_call.1} parent=1 // loop_footer
      %s20 = sadd.s32 1, %s16
    $region7: #{tpu_custom_call.1} parent=1 // loop_footer_branch
      %15 = sbr.rel target = $region3
    $region8: #{tpu_custom_call.1} parent=1 // loop_exit
      _
    %237 = vsyncpa [#allocation5], 1
    %s238 = scalar_lea.sflag [#allocation5], 1
    %239 = vsyncpa %s238, 1
    %240 = vsyncpa [#allocation6], 1
    %s241 = scalar_lea.sflag [#allocation6], 1
    %242 = vsyncpa %s241, 1

</llo_original>
